<compile_context>
chip_gen: v6e
topology: v6e:2x2x1
jax: 0.10.0
libtpu: 0.0.40
codegen_flags: <defaults>
</compile_context>

<pallas_src>
import jax
import jax.numpy as jnp
from jax import lax
from jax.experimental import pallas as pl
from jax.experimental.pallas import tpu as pltpu


def _round_up(x: int, m: int) -> int:
    return ((x + m - 1) // m) * m


# ----------------------------------------------------------------------------------
# SeparationLoss — single prototype set (N, D) -> scalar
# ----------------------------------------------------------------------------------
def _separation_loss_kernel(protos_ref, out_ref):
    # protos_ref: full (N, D) array resident in VMEM (no grid).
    # out_ref:    (1, 1) f32 in SMEM (scalar store, no padded VMEM writeback).
    p = protos_ref[...]                                       # native dtype; MXU takes bf16/f32
    n = p.shape[0]

    # Gram matrix on the MXU: contract dim 1 with dim 1 (no explicit transpose).
    gram = lax.dot_general(
        p, p,
        dimension_numbers=(((1,), (1,)), ((), ())),
        preferred_element_type=jnp.float32,
    )                                                          # (N, N) f32

    # Fused diagonal correction: single select, no materialized eye/mask-subtract pass.
    row_ids = lax.broadcasted_iota(jnp.int32, (n, n), 0)
    col_ids = lax.broadcasted_iota(jnp.int32, (n, n), 1)
    m = jnp.where(row_ids == col_ids, gram - jnp.float32(2.0), gram)

    row_max = jnp.max(m, axis=1, keepdims=True)                # (N, 1)
    out_ref[0, 0] = jnp.sum(row_max) * jnp.float32(1.0 / n)


def separation_loss(protos: jax.Array) -> jax.Array:
    """protos: (N, D). Returns scalar f32 loss.

    NOTE: whole-array VMEM path is sized for FedHP-scale N (= num_classes, small).
    For very large N the (N, N) intermediates should be row-tiled instead
    (see the batched kernel for the blocked pattern).
    """
    out = pl.pallas_call(
        _separation_loss_kernel,
        out_shape=jax.ShapeDtypeStruct((1, 1), jnp.float32),
        in_specs=[pl.BlockSpec(memory_space=pltpu.MemorySpace.VMEM)],
        out_specs=pl.BlockSpec(memory_space=pltpu.MemorySpace.SMEM),
    )(protos)
    return out[0, 0]


# ----------------------------------------------------------------------------------
# SeparationLoss — batched: (B, N, D) -> (B,) losses, B_blk sets per grid step
# ----------------------------------------------------------------------------------
def _separation_loss_batched_kernel(protos_ref, out_ref):
    # protos_ref: (B_blk, N, D) VMEM block for this grid step.
    # out_ref:    (1, 1, B_blk) lane-dense VMEM output block for this grid step.
    p = protos_ref[...]                                        # native dtype straight to MXU
    n = p.shape[1]

    # One batched gram for all B_blk sets in this step (f32 accumulation).
    grams = jnp.einsum(
        "bnd,bmd->bnm", p, p, preferred_element_type=jnp.float32
    )                                                          # (B_blk, N, N)

    # Diagonal mask: built ONCE per grid step, broadcast across the B_blk sets.
    row_ids = lax.broadcasted_iota(jnp.int32, (n, n), 0)
    col_ids = lax.broadcasted_iota(jnp.int32, (n, n), 1)
    diag = (row_ids == col_ids)[None, :, :]                    # (1, N, N)
    m = jnp.where(diag, grams - jnp.float32(2.0), grams)

    row_max = jnp.max(m, axis=2)                               # (B_blk, N)
    losses = jnp.sum(row_max, axis=1) * jnp.float32(1.0 / n)   # (B_blk,)
    out_ref[...] = losses[None, None, :]                       # lane-dense store


def separation_loss_batched(protos: jax.Array, *, b_blk: int = 128) -> jax.Array:
    """protos: (B, N, D). Returns (B,) f32 losses, one per prototype set."""
    bsz, n, d = protos.shape
    b_pad = _round_up(bsz, b_blk)
    if b_pad != bsz:
        # Zero-padded sets produce garbage losses that are sliced off below.
        protos = jnp.pad(protos, ((0, b_pad - bsz), (0, 0), (0, 0)))
    nblk = b_pad // b_blk

    out = pl.pallas_call(
        _separation_loss_batched_kernel,
        out_shape=jax.ShapeDtypeStruct((nblk, 1, b_blk), jnp.float32),
        grid=(nblk,),
        in_specs=[pl.BlockSpec((b_blk, n, d), lambda i: (i, 0, 0))],
        out_specs=pl.BlockSpec((1, 1, b_blk), lambda i: (i, 0, 0)),
        # Each step owns a distinct output block -> safe to shard across TCs (v7x).
        compiler_params=pltpu.CompilerParams(dimension_semantics=("parallel",)),
    )(protos)
    return out.reshape(b_pad)[:bsz]


# ----------------------------------------------------------------------------------
# FedHPModel.forward head: argmax over class logits, dim=1 (tiled over batch)
# ----------------------------------------------------------------------------------
def _argmax_rows_kernel(logits_ref, out_ref):
    x = logits_ref[...]                                        # (TILE_B, C), native dtype
    c = x.shape[1]
    row_max = jnp.max(x, axis=1, keepdims=True)                # (TILE_B, 1)
    col_ids = lax.broadcasted_iota(jnp.int32, x.shape, 1)
    # First index achieving the row max (matches torch.argmax tie behavior).
    cand = jnp.where(x == row_max, col_ids, jnp.int32(c))
    idx = jnp.min(cand, axis=1, keepdims=True)                 # (TILE_B, 1)
    # Guard: all-NaN row would otherwise emit C (out of range); clamp to valid index.
    out_ref[...] = jnp.minimum(idx, jnp.int32(c - 1))


def argmax_rows(logits: jax.Array, *, tile_b: int = 512) -> jax.Array:
    """logits: (B, C). Returns (B,) int32 argmax along dim=1."""
    bsz, c = logits.shape
    tile_b = min(tile_b, _round_up(bsz, 8))
    b_pad = _round_up(bsz, tile_b)
    if b_pad != bsz:
        logits = jnp.pad(logits, ((0, b_pad - bsz), (0, 0)))

    out = pl.pallas_call(
        _argmax_rows_kernel,
        out_shape=jax.ShapeDtypeStruct((b_pad, 1), jnp.int32),
        grid=(b_pad // tile_b,),
        in_specs=[pl.BlockSpec((tile_b, c), lambda i: (i, 0))],
        out_specs=pl.BlockSpec((tile_b, 1), lambda i: (i, 0)),
        compiler_params=pltpu.CompilerParams(dimension_semantics=("parallel",)),
    )(logits)
    return out[:bsz, 0]


# ----------------------------------------------------------------------------------
# Pure-JAX references
# ----------------------------------------------------------------------------------
def _separation_loss_ref(protos: jax.Array) -> jax.Array:
    p = protos.astype(jnp.float32)
    m = p @ p.T - 2.0 * jnp.eye(p.shape[0], dtype=jnp.float32)
    return jnp.mean(jnp.max(m, axis=1))


if __name__ == "__main__":
    key = jax.random.PRNGKey(0)
    k1, k2, k3 = jax.random.split(key, 3)

    # SeparationLoss: N prototypes (= num_classes), embedding dim D.
    N, D = 8, 32
    protos = jax.random.normal(k1, (N, D), dtype=jnp.float32)
    loss = jax.block_until_ready(separation_loss(protos))
    ref = jax.block_until_ready(_separation_loss_ref(protos))
    assert jnp.allclose(loss, ref, atol=1e-5, rtol=1e-5), (loss, ref)

    # Batched SeparationLoss: B prototype sets, blocked B_blk per grid step.
    B = 4
    protos_b = jax.random.normal(k2, (B, N, D), dtype=jnp.float32)
    losses = jax.block_until_ready(separation_loss_batched(protos_b))
    refs = jax.block_until_ready(jax.vmap(_separation_loss_ref)(protos_b))
    assert jnp.allclose(losses, refs, atol=1e-5, rtol=1e-5), (losses, refs)

    # FedHPModel.forward head: argmax over class logits (backbone untranslated).
    batch, n_classes = 8, 10
    logits = jax.random.normal(k3, (batch, n_classes), dtype=jnp.float32)
    pred = jax.block_until_ready(argmax_rows(logits))
    pred_ref = jnp.argmax(logits, axis=1).astype(jnp.int32)
    assert jnp.array_equal(pred, pred_ref), (pred, pred_ref)

    print("KERNEL_OK")
</pallas_src>

<mosaic_0001>
module attributes {stable_mosaic.version = 11 : i64} {
  func.func @_separation_loss_kernel(%arg0: memref<8x32xf32, #tpu.memory_space<vmem>>, %arg1: memref<1x1xf32, #tpu.memory_space<smem>>) attributes {dimension_semantics = [], scalar_prefetch = 0 : i64, scratch_operands = 0 : i64, tpu.core_type = #tpu.core_type<tc>} {
    %c0 = arith.constant 0 : index
    %c0_0 = arith.constant 0 : index
    %0 = vector.load %arg0[%c0, %c0_0] : memref<8x32xf32, #tpu.memory_space<vmem>>, vector<8x32xf32>
    %cst = arith.constant dense<0.000000e+00> : vector<8x8xf32>
    %1 = tpu.matmul %0, %0, %cst {dimension_numbers = #tpu.dot_dimension_numbers<[1], [1], [0], [0], [0, 0, 1, 0], [], []>} : vector<8x32xf32>, vector<8x32xf32>, vector<8x8xf32> -> vector<8x8xf32>
    %2 = tpu.iota {dimensions = array<i32: 0>} : vector<8x8xi32>
    %3 = tpu.iota {dimensions = array<i32: 1>} : vector<8x8xi32>
    %4 = arith.cmpi eq, %2, %3 : vector<8x8xi32>
    %cst_1 = arith.constant 2.000000e+00 : f32
    %5 = vector.broadcast %cst_1 : f32 to vector<8x8xf32>
    %6 = arith.subf %1, %5 : vector<8x8xf32>
    %7 = arith.select %4, %6, %1 : vector<8x8xi1>, vector<8x8xf32>
    %cst_2 = arith.constant dense<0xFF800000> : vector<8xf32>
    %8 = vector.multi_reduction <maximumf>, %7, %cst_2 [1] : vector<8x8xf32> to vector<8xf32>
    %9 = vector.shape_cast %8 : vector<8xf32> to vector<8x1xf32>
    %10 = vector.shape_cast %9 : vector<8x1xf32> to vector<1x8x1xf32>
    %cst_3 = arith.constant dense<0.000000e+00> : vector<1xf32>
    %11 = vector.multi_reduction <add>, %10, %cst_3 [1, 2] : vector<1x8x1xf32> to vector<1xf32>
    %12 = vector.shape_cast %11 : vector<1xf32> to vector<1x1x1xf32>
    %13 = vector.extract %12[0, 0, 0] : f32 from vector<1x1x1xf32>
    %cst_4 = arith.constant 1.250000e-01 : f32
    %14 = arith.mulf %13, %cst_4 : f32
    %c0_5 = arith.constant 0 : index
    %c0_6 = arith.constant 0 : index
    %15 = memref.load %arg1[%c0_5, %c0_6] : memref<1x1xf32, #tpu.memory_space<smem>>
    memref.store %14, %arg1[%c0_5, %c0_6] : memref<1x1xf32, #tpu.memory_space<smem>>
    return
  }
}

</mosaic_0001>

<llo_original>
// kernel: tpu_custom_call.1
$region0: #{tpu_custom_call.1}
  #allocation0 [shape = 'u32[]', space=smem, size = 0x4, offset = 0x4, fixed_abs, tag = 'smem constant byte address 0x4 - core index']
  #allocation1 [shape = 'u32[144,128]{1,0:T(1,128)}', space=vmem, size = 0x12000, scoped, tag = 'internal scratch']
  %s0 = inlined_call_operand.hbm [shape: f32[8,32], index: 0, kind: input, shape index: {}]
  %s1 = inlined_call_operand.hbm [shape: f32[1,1], index: 1, kind: output, shape index: {}]
  %s2 = sld [smem:[#allocation0]]
  $region18: #{tpu_custom_call.1} parent=0
    _
  %s4 = ssub.s32 1, %s2
  %s5 = scalar_select 0, %s4, %s2
  $region1: #{tpu_custom_call.1} parent=0
    #allocation2 [shape = 'u8[4096]{0}', space=vmem, size = 0x1000, scoped, tag = 'input window, operand 0, single buffered']
    #allocation3 [shape = 's32[1]{0}', space=sflag, size = 0x4, scoped, tag = 'scoped memory for tpu_custom_call.1']
    #allocation4 [shape = 's32[1]{0}', space=sflag, size = 0x4, scoped, tag = 'scoped memory for tpu_custom_call.1']
    #allocation5 [shape = 'u8[512]{0}', space=smem, size = 0x200, scoped, tag = 'output window, operand 0, single buffered']
    %6 = vsyncpa [#allocation3], 0
    %7 = vsyncpa [#allocation4], 0
    // Predicated region
    $region2: #{tpu_custom_call.1} parent=1 // pred_check
      _
    $region3: #{tpu_custom_call.1} parent=1 // pred_check_branch
      %9 = sbr.rel (0) target = $region5
    $region4: #{tpu_custom_call.1} parent=1 // pred_region
      %s11 = ssub.s32 128, 128
      %12 = vsyncadd [#allocation3], %s11
      %s14 = sshll.u32 [#allocation2], 4
      %s15 = int_to_ptr.vmem [resolvable:$true] %s14
      %17 = dma.hbm_to_vmem [thread:$0]  %s0, 128, %s15, [#allocation3]
    $region5: #{tpu_custom_call.1} parent=1 // pred_fallthru
      _
    // Predicated region
    $region6: #{tpu_custom_call.1} parent=1 // pred_check
      _
    $region7: #{tpu_custom_call.1} parent=1 // pred_check_branch
      %19 = sbr.rel (0) target = $region9
    $region8: #{tpu_custom_call.1} parent=1 // pred_region
      %20 = dma.done [#allocation3], 128
    $region9: #{tpu_custom_call.1} parent=1 // pred_fallthru
      _
    %v21 = vld [vmem:[#allocation2] sm:$0xff]
    %vm22 = vcmask 261120
    %v24 = vsel %vm22, %v21, 0
    %26 = vmatprep.subr.mxu0 0.0
    %27 = vmatpush1.xpose.msra.mxu0 0.0
    %28 = vmatprep.subr.mxu0 0.0
    %29 = vmatpush1.xpose.msra.mxu0 0.0
    %30 = vmatprep.subr.mxu0 0.0
    %31 = vmatpush1.xpose.msra.mxu0 0.0
    %32 = vmatprep.subr.mxu0 0.0
    %33 = vmatpush1.xpose.msra.mxu0 0.0
    %34 = vmatprep.subr.mxu0 0.0
    %35 = vmatpush1.xpose.msra.mxu0 0.0
    %36 = vmatprep.subr.mxu0 0.0
    %37 = vmatpush1.xpose.msra.mxu0 0.0
    %38 = vmatprep.subr.mxu0 0.0
    %39 = vmatpush1.xpose.msra.mxu0 0.0
    %40 = vmatprep.subr.mxu0 0.0
    %41 = vmatpush1.xpose.msra.mxu0 0.0
    %42 = vmatprep.subr.mxu0 0.0
    %43 = vmatpush1.xpose.msra.mxu0 0.0
    %44 = vmatprep.subr.mxu0 0.0
    %45 = vmatpush1.xpose.msra.mxu0 0.0
    %46 = vmatprep.subr.mxu0 0.0
    %47 = vmatpush1.xpose.msra.mxu0 0.0
    %48 = vmatprep.subr.mxu0 0.0
    %49 = vmatpush1.xpose.msra.mxu0 0.0
    %50 = vmatprep.subr.mxu0 0.0
    %51 = vmatpush1.xpose.msra.mxu0 0.0
    %52 = vmatprep.subr.mxu0 0.0
    %53 = vmatpush1.xpose.msra.mxu0 0.0
    %54 = vmatprep.subr.mxu0 0.0
    %55 = vmatpush1.xpose.msra.mxu0 0.0
    %56 = vmatprep.subr.mxu0 0.0
    %57 = vmatpush1.xpose.msra.mxu0 %v24
    %58 = vmatprep.subr.mxu0 0.0
    %59 = vmatpush2.xpose.msra.mxu0 0.0
    %60 = vmatprep.subr.mxu0 0.0
    %61 = vmatpush2.xpose.msra.mxu0 0.0
    %62 = vmatprep.subr.mxu0 0.0
    %63 = vmatpush2.xpose.msra.mxu0 0.0
    %64 = vmatprep.subr.mxu0 0.0
    %65 = vmatpush2.xpose.msra.mxu0 0.0
    %66 = vmatprep.subr.mxu0 0.0
    %67 = vmatpush2.xpose.msra.mxu0 0.0
    %68 = vmatprep.subr.mxu0 0.0
    %69 = vmatpush2.xpose.msra.mxu0 0.0
    %70 = vmatprep.subr.mxu0 0.0
    %71 = vmatpush2.xpose.msra.mxu0 0.0
    %72 = vmatprep.subr.mxu0 0.0
    %73 = vmatpush2.xpose.msra.mxu0 0.0
    %74 = vmatprep.subr.mxu0 0.0
    %75 = vmatpush2.xpose.msra.mxu0 0.0
    %76 = vmatprep.subr.mxu0 0.0
    %77 = vmatpush2.xpose.msra.mxu0 0.0
    %78 = vmatprep.subr.mxu0 0.0
    %79 = vmatpush2.xpose.msra.mxu0 0.0
    %80 = vmatprep.subr.mxu0 0.0
    %81 = vmatpush2.xpose.msra.mxu0 0.0
    %82 = vmatprep.subr.mxu0 0.0
    %83 = vmatpush2.xpose.msra.mxu0 0.0
    %84 = vmatprep.subr.mxu0 0.0
    %85 = vmatpush2.xpose.msra.mxu0 0.0
    %86 = vmatprep.subr.mxu0 0.0
    %87 = vmatpush2.xpose.msra.mxu0 0.0
    %88 = vmatprep.subr.mxu0 0.0
    %89 = vmatpush2.xpose.msra.mxu0 0.0
    %90 = vmatprep.mubr.f32.mxu0 0.0
    %91 = vmatmul.mubr.f32.gmra.mxu0 %v24
    %v92 = vpop.f32.mrf.mxu0
    %v93 = vadd.f32 0.0, %v92
    %v94 = vpop.f32.mrf.mxu0
    %95 = vdwg.mxu0
    %v96 = vlaneseq
    %v97 = vshrl.u32 %v96, 7
    %v98 = vlaneseq
    %v99 = vand.u32 %v98, 127
    %vm100 = vcmp.eq.s32.totalorder %v97, %v99
    %v101 = vsub.f32 %v93, 2.0
    %v102 = vsel %vm100, %v101, %v93
    %vm103 = vcmask 64512
    %v104 = vsel %vm103, %v102, -inf
    %105 = vmax.xlane.f32.xlu0 %v104
    %v106 = vpop.xlane.xlu0 %105
    %vm107 = vcmask 7168
    %v108 = vsel %vm107, %v106, 0.0
    %109 = vadd.xlane.f32.xlu0 %v108
    %v110 = vpop.xlane.xlu0 %109
    %v111 = vrot.slane %v110, 4
    %v112 = vadd.f32 %v110, %v111
    %v113 = vrot.slane %v112, 2
    %v114 = vadd.f32 %v112, %v113
    %v115 = vrot.slane %v114, 1
    %v116 = vadd.f32 %v114, %v115
    %s117 = vtos %v116
    %s118 = smul.f32 %s117, 0.125
    %s119 = scalar_lea.smem [#allocation5], 0
    %120 = sst [smem:[%s119]] %s118
    // Predicated region
    $region10: #{tpu_custom_call.1} parent=1 // pred_check
      _
    $region11: #{tpu_custom_call.1} parent=1 // pred_check_branch
      %122 = sbr.rel (0) target = $region13
    $region12: #{tpu_custom_call.1} parent=1 // pred_region
      %s124 = ssub.s32 16, 16
      %125 = vsyncadd [#allocation4], %s124
      %128 = dma.smem_to_hbm [#allocation5], 16, %s1, [#allocation4]
    $region13: #{tpu_custom_call.1} parent=1 // pred_fallthru
      _
    // Predicated region
    $region14: #{tpu_custom_call.1} parent=1 // pred_check
      _
    $region15: #{tpu_custom_call.1} parent=1 // pred_check_branch
      %130 = sbr.rel (0) target = $region17
    $region16: #{tpu_custom_call.1} parent=1 // pred_region
      %131 = dma.done [#allocation4], 16
    $region17: #{tpu_custom_call.1} parent=1 // pred_fallthru
      _
    %132 = sfence
    %133 = vsyncpa [#allocation3], 1
    %134 = vsyncpa [#allocation4], 1

</llo_original>
